<compile_context>
chip_gen: v7x
topology: tpu7x:2x2x1
jax: 0.10.0
libtpu: 0.0.40
codegen_flags: <defaults>
</compile_context>

<pallas_src>
import functools

import jax
import jax.numpy as jnp
from jax.experimental import pallas as pl
from jax.experimental.pallas import tpu as pltpu


def _make_encoder_kernel(eup_bf16: bool):
    def encoder_kernel(x_ref, gamma_ref, beta_ref, w_ref, bias_ref, o_ref):
        # x_ref:      [TM, H] f32  gathered token embeddings (tiled over tokens)
        # gamma/beta: [1,  H] f32  LayerNorm affine params (resident, single-buffered)
        # w_ref:      [H,  H] bf16 dense projection weight (resident, single-buffered)
        # bias_ref:   [1,  H] f32  projection bias (resident, single-buffered)
        # o_ref:      [TM, H] bf16 output tile
        x = x_ref[...]

        # LayerNorm over the hidden (lane) axis, f32-exact.
        mu = jnp.mean(x, axis=-1, keepdims=True)
        xc = x - mu
        var = jnp.mean(xc * xc, axis=-1, keepdims=True)
        xn = xc * jax.lax.rsqrt(var + 1e-5)
        h = xn * gamma_ref[...] + beta_ref[...]

        # Dense projection on the MXU in bf16 (f32 accumulate) + bias.
        y = jnp.dot(h.astype(jnp.bfloat16), w_ref[...],
                    preferred_element_type=jnp.float32)
        y = y + bias_ref[...]

        # Pooler tanh: bf16 EUP path on v6e/v7x, f32 on v5e/older.
        if eup_bf16:
            o_ref[...] = jnp.tanh(y.astype(jnp.bfloat16)).astype(o_ref.dtype)
        else:
            o_ref[...] = jnp.tanh(y).astype(o_ref.dtype)

    return encoder_kernel


def _tpu_tuning():
    """Generation-aware VMEM limit and bf16-EUP flag (best effort, safe fallbacks)."""
    vmem_cap = 128 * 1024 * 1024
    try:
        vmem_cap = int(pltpu.get_tpu_info().vmem_capacity_bytes)
    except Exception:
        pass
    # ~7/8 of physical, capped at ~100 MiB: ~56 MiB on v7x (64 MiB), ~100 MiB on v5e/v6e.
    vmem_limit = int(min((vmem_cap * 7) // 8, 100 * 1024 * 1024))

    kind = ""
    try:
        kind = jax.devices()[0].device_kind.lower()
    except Exception:
        pass
    # v5e (and older) have no bf16 EUP/VPU path -> keep tanh in f32 there.
    eup_bf16 = not any(tag in kind for tag in ("v2", "v3", "v4", "v5"))
    return vmem_limit, eup_bf16


def model_forward(token_ids, emb_table, gamma, beta, w, bias, *, tm=256):
    """token_ids: [B, S] int32 -> hidden states [B, S, H] bfloat16."""
    B, S = token_ids.shape
    V, H = emb_table.shape
    assert H % 128 == 0, "hidden_size must be lane-aligned (multiple of 128)"
    # TODO(synk): mask the LayerNorm reduction for hidden sizes not a multiple of 128.

    M = B * S
    Mp = pl.cdiv(M, tm) * tm

    # Embedding gather in XLA (f32 -> LN inputs stay f32-exact); clamp OOB ids.
    ids = jnp.clip(token_ids.reshape(M).astype(jnp.int32), 0, V - 1)
    x = jnp.take(emb_table, ids, axis=0)                       # [M, H] f32
    if Mp != M:
        x = jnp.pad(x, ((0, Mp - M), (0, 0)))                  # padded rows sliced off below

    w_bf16 = w.astype(jnp.bfloat16)                            # MXU-native bf16 weights
    vmem_limit, eup_bf16 = _tpu_tuning()

    # Resident operands: constant block index -> single buffer is enough.
    resident = functools.partial(pl.BlockSpec, pipeline_mode=pl.Buffered(1))

    out2d = pl.pallas_call(
        _make_encoder_kernel(eup_bf16),
        out_shape=jax.ShapeDtypeStruct((Mp, H), jnp.bfloat16),  # bf16 writeback (halve HBM bytes)
        grid_spec=pl.GridSpec(
            grid=(Mp // tm,),
            in_specs=[
                pl.BlockSpec((tm, H), lambda i: (i, 0)),        # activations (tiled, double-buffered)
                resident((1, H), lambda i: (0, 0)),             # gamma
                resident((1, H), lambda i: (0, 0)),             # beta
                resident((H, H), lambda i: (0, 0)),             # W
                resident((1, H), lambda i: (0, 0)),             # bias
            ],
            out_specs=pl.BlockSpec((tm, H), lambda i: (i, 0)),
        ),
        compiler_params=pltpu.CompilerParams(
            dimension_semantics=("parallel",),
            vmem_limit_bytes=vmem_limit,
        ),
    )(x, gamma, beta, w_bf16, bias)

    return out2d[:M].reshape(B, S, H)


def reference_forward(token_ids, emb_table, gamma, beta, w, bias):
    x = emb_table[token_ids].astype(jnp.float32)
    mu = jnp.mean(x, axis=-1, keepdims=True)
    var = jnp.mean((x - mu) ** 2, axis=-1, keepdims=True)
    xn = (x - mu) / jnp.sqrt(var + 1e-5)
    h = xn * gamma[0] + beta[0]
    y = jnp.einsum("bsh,hk->bsk", h, w) + bias[0]
    return jnp.tanh(y)


if __name__ == "__main__":
    # Small but lane-aligned shapes: H=128, M = 2*512 = 1024 tokens -> grid of 4
    # 256-row tiles (exercises the pipeline and megacore sharding on v7x).
    B, S, H, V = 2, 512, 128, 1024

    key = jax.random.PRNGKey(0)
    k_ids, k_emb, k_g, k_b, k_w, k_wb = jax.random.split(key, 6)

    token_ids = jax.random.randint(k_ids, (B, S), 0, V, dtype=jnp.int32)
    emb_table = jax.random.normal(k_emb, (V, H), dtype=jnp.float32) * 0.02
    gamma = 1.0 + 0.01 * jax.random.normal(k_g, (1, H), dtype=jnp.float32)
    beta = 0.01 * jax.random.normal(k_b, (1, H), dtype=jnp.float32)
    w = jax.random.normal(k_w, (H, H), dtype=jnp.float32) / jnp.sqrt(H)
    bias = 0.01 * jax.random.normal(k_wb, (1, H), dtype=jnp.float32)

    out = model_forward(token_ids, emb_table, gamma, beta, w, bias)
    out = jax.block_until_ready(out)

    ref = reference_forward(token_ids, emb_table, gamma, beta, w, bias)
    assert out.shape == (B, S, H)
    # bf16 MXU path + bf16 output -> looser tolerance than the pure-f32 reference.
    assert jnp.allclose(out.astype(jnp.float32), ref, atol=3e-2, rtol=3e-2), (
        float(jnp.max(jnp.abs(out.astype(jnp.float32) - ref))))

    print("KERNEL_OK")
</pallas_src>

<mosaic_0001>
module attributes {stable_mosaic.version = 11 : i64} {
  func.func @encoder_kernel(%arg0: i32, %arg1: memref<256x128xf32, #tpu.memory_space<vmem>>, %arg2: memref<1x128xf32, #tpu.memory_space<vmem>>, %arg3: memref<1x128xf32, #tpu.memory_space<vmem>>, %arg4: memref<128x128xbf16, #tpu.memory_space<vmem>>, %arg5: memref<1x128xf32, #tpu.memory_space<vmem>>, %arg6: memref<256x128xbf16, #tpu.memory_space<vmem>>) attributes {dimension_semantics = [#tpu.dimension_semantics<parallel>], iteration_bounds = array<i64: 4>, scalar_prefetch = 0 : i64, scratch_operands = 0 : i64, tpu.core_type = #tpu.core_type<tc>, window_params = [{transform_indices = @transform_0, window_bounds = array<i64: 256, 128>}, {pipeline_mode = #tpu.pipeline_mode<synchronous>, transform_indices = @transform_1, window_bounds = array<i64: 1, 128>}, {pipeline_mode = #tpu.pipeline_mode<synchronous>, transform_indices = @transform_2, window_bounds = array<i64: 1, 128>}, {pipeline_mode = #tpu.pipeline_mode<synchronous>, transform_indices = @transform_3, window_bounds = array<i64: 128, 128>}, {pipeline_mode = #tpu.pipeline_mode<synchronous>, transform_indices = @transform_4, window_bounds = array<i64: 1, 128>}, {transform_indices = @transform_5, window_bounds = array<i64: 256, 128>}]} {
    %c0 = arith.constant 0 : index
    %c0_0 = arith.constant 0 : index
    %0 = vector.load %arg1[%c0, %c0_0] : memref<256x128xf32, #tpu.memory_space<vmem>>, vector<256x128xf32>
    %cst = arith.constant dense<0.000000e+00> : vector<256xf32>
    %1 = vector.multi_reduction <add>, %0, %cst [1] : vector<256x128xf32> to vector<256xf32>
    %2 = vector.shape_cast %1 : vector<256xf32> to vector<256x1xf32>
    %cst_1 = arith.constant 1.280000e+02 : f32
    %3 = vector.broadcast %cst_1 : f32 to vector<256x1xf32>
    %4 = arith.divf %2, %3 : vector<256x1xf32>
    %5 = vector.broadcast %4 : vector<256x1xf32> to vector<256x128xf32>
    %6 = arith.subf %0, %5 : vector<256x128xf32>
    %7 = arith.mulf %6, %6 : vector<256x128xf32>
    %cst_2 = arith.constant dense<0.000000e+00> : vector<256xf32>
    %8 = vector.multi_reduction <add>, %7, %cst_2 [1] : vector<256x128xf32> to vector<256xf32>
    %9 = vector.shape_cast %8 : vector<256xf32> to vector<256x1xf32>
    %cst_3 = arith.constant 1.280000e+02 : f32
    %10 = vector.broadcast %cst_3 : f32 to vector<256x1xf32>
    %11 = arith.divf %9, %10 : vector<256x1xf32>
    %cst_4 = arith.constant 9.99999974E-6 : f32
    %12 = vector.broadcast %cst_4 : f32 to vector<256x1xf32>
    %13 = arith.addf %11, %12 : vector<256x1xf32>
    %14 = math.rsqrt %13 : vector<256x1xf32>
    %15 = vector.broadcast %14 : vector<256x1xf32> to vector<256x128xf32>
    %16 = arith.mulf %6, %15 : vector<256x128xf32>
    %c0_5 = arith.constant 0 : index
    %c0_6 = arith.constant 0 : index
    %17 = vector.load %arg2[%c0_5, %c0_6] : memref<1x128xf32, #tpu.memory_space<vmem>>, vector<1x128xf32>
    %18 = vector.broadcast %17 : vector<1x128xf32> to vector<256x128xf32>
    %19 = arith.mulf %16, %18 : vector<256x128xf32>
    %c0_7 = arith.constant 0 : index
    %c0_8 = arith.constant 0 : index
    %20 = vector.load %arg3[%c0_7, %c0_8] : memref<1x128xf32, #tpu.memory_space<vmem>>, vector<1x128xf32>
    %21 = vector.broadcast %20 : vector<1x128xf32> to vector<256x128xf32>
    %22 = arith.addf %19, %21 : vector<256x128xf32>
    %23 = arith.truncf %22 : vector<256x128xf32> to vector<256x128xbf16>
    %c0_9 = arith.constant 0 : index
    %c0_10 = arith.constant 0 : index
    %24 = vector.load %arg4[%c0_9, %c0_10] : memref<128x128xbf16, #tpu.memory_space<vmem>>, vector<128x128xbf16>
    %cst_11 = arith.constant dense<0.000000e+00> : vector<256x128xf32>
    %25 = tpu.matmul %23, %24, %cst_11 {dimension_numbers = #tpu.dot_dimension_numbers<[1], [0], [0], [1], [0, 0, 1, 1], [], []>} : vector<256x128xbf16>, vector<128x128xbf16>, vector<256x128xf32> -> vector<256x128xf32>
    %c0_12 = arith.constant 0 : index
    %c0_13 = arith.constant 0 : index
    %26 = vector.load %arg5[%c0_12, %c0_13] : memref<1x128xf32, #tpu.memory_space<vmem>>, vector<1x128xf32>
    %27 = vector.broadcast %26 : vector<1x128xf32> to vector<256x128xf32>
    %28 = arith.addf %25, %27 : vector<256x128xf32>
    %29 = arith.truncf %28 : vector<256x128xf32> to vector<256x128xbf16>
    %30 = math.tanh %29 : vector<256x128xbf16>
    %c0_14 = arith.constant 0 : index
    %c0_15 = arith.constant 0 : index
    %31 = vector.load %arg6[%c0_14, %c0_15] : memref<256x128xbf16, #tpu.memory_space<vmem>>, vector<256x128xbf16>
    tpu.vector_store %arg6[%c0_14, %c0_15], %30 {strides = array<i32>} : memref<256x128xbf16, #tpu.memory_space<vmem>>, vector<256x128xbf16>,
    return
  }
  func.func @transform_0(%arg0: i32) -> (i32, i32) {
    %c0_i32 = arith.constant 0 : i32
    %c0_i32_0 = arith.constant 0 : i32
    return %arg0, %c0_i32 : i32, i32
  }
  func.func @transform_1(%arg0: i32) -> (i32, i32) {
    %c0_i32 = arith.constant 0 : i32
    %c0_i32_0 = arith.constant 0 : i32
    %c0_i32_1 = arith.constant 0 : i32
    return %c0_i32, %c0_i32_0 : i32, i32
  }
  func.func @transform_2(%arg0: i32) -> (i32, i32) {
    %c0_i32 = arith.constant 0 : i32
    %c0_i32_0 = arith.constant 0 : i32
    %c0_i32_1 = arith.constant 0 : i32
    return %c0_i32, %c0_i32_0 : i32, i32
  }
  func.func @transform_3(%arg0: i32) -> (i32, i32) {
    %c0_i32 = arith.constant 0 : i32
    %c0_i32_0 = arith.constant 0 : i32
    %c0_i32_1 = arith.constant 0 : i32
    return %c0_i32, %c0_i32_0 : i32, i32
  }
  func.func @transform_4(%arg0: i32) -> (i32, i32) {
    %c0_i32 = arith.constant 0 : i32
    %c0_i32_0 = arith.constant 0 : i32
    %c0_i32_1 = arith.constant 0 : i32
    return %c0_i32, %c0_i32_0 : i32, i32
  }
  func.func @transform_5(%arg0: i32) -> (i32, i32) {
    %c0_i32 = arith.constant 0 : i32
    %c0_i32_0 = arith.constant 0 : i32
    return %arg0, %c0_i32 : i32, i32
  }
}

</mosaic_0001>

<llo_original>
// kernel: tpu_custom_call.1
$region0: #{tpu_custom_call.1}
  #allocation0 [shape = 'u32[]', space=smem, size = 0x4, offset = 0x4, fixed_abs, tag = 'smem constant byte address 0x4 - core index']
  #allocation1 [shape = 'u32[144,128]{1,0:T(1,128)}', space=vmem, size = 0x12000, scoped, tag = 'internal scratch']
  %s0 = inlined_call_operand.hbm [shape: f32[1024,128], index: 0, kind: input, shape index: {}]
  %s1 = inlined_call_operand.hbm [shape: f32[1,128], index: 1, kind: input, shape index: {}]
  %s2 = inlined_call_operand.hbm [shape: f32[1,128], index: 2, kind: input, shape index: {}]
  %s3 = inlined_call_operand.hbm [shape: bf16[128,128], index: 3, kind: input, shape index: {}]
  %s4 = inlined_call_operand.hbm [shape: f32[1,128], index: 4, kind: input, shape index: {}]
  %s5 = inlined_call_operand.hbm [shape: bf16[1024,128], index: 5, kind: output, shape index: {}]
  %s6 = sld [smem:[#allocation0]]
  $region73: #{tpu_custom_call.1} parent=0
    _
  %s8 = ssub.s32 1, %s6
  %s9 = scalar_select 0, %s8, %s6
  $region1: #{tpu_custom_call.1} parent=0
    #allocation2 [shape = 'u8[262144]{0}', space=vmem, size = 0x40000, scoped, tag = 'input window, operand 0']
    #allocation3 [shape = 's32[2]{0}', space=sflag, size = 0x8, scoped, tag = 'scoped memory for tpu_custom_call.1']
    #allocation4 [shape = 's32[2]{0}', space=sflag, size = 0x8, scoped, tag = 'scoped memory for tpu_custom_call.1']
    #allocation5 [shape = 'u8[512]{0}', space=vmem, size = 0x400, scoped, tag = 'input window, operand 1, single buffered']
    #allocation6 [shape = 's32[1]{0}', space=sflag, size = 0x4, scoped, tag = 'scoped memory for tpu_custom_call.1']
    #allocation7 [shape = 'u8[512]{0}', space=vmem, size = 0x400, scoped, tag = 'input window, operand 2, single buffered']
    #allocation8 [shape = 'u8[32768]{0}', space=vmem, size = 0x8000, scoped, tag = 'input window, operand 3, single buffered']
    #allocation9 [shape = 's32[1]{0}', space=sflag, size = 0x4, scoped, tag = 'scoped memory for tpu_custom_call.1']
    #allocation10 [shape = 'u8[512]{0}', space=vmem, size = 0x400, scoped, tag = 'input window, operand 4, single buffered']
    #allocation11 [shape = 'u8[131072]{0}', space=vmem, size = 0x20000, scoped, tag = 'output window, operand 0']
    %10 = vsyncpa [#allocation3], 0
    %s11 = scalar_lea.sflag [#allocation3], 1
    %12 = vsyncpa %s11, 0
    %13 = vsyncpa [#allocation6], 0
    %14 = vsyncpa [#allocation9], 0
    %15 = vsyncpa [#allocation4], 0
    %s16 = scalar_lea.sflag [#allocation4], 1
    %17 = vsyncpa %s16, 0
    loop: start=0, step=1, limit=6
    $region2: #{tpu_custom_call.1} parent=1 // loop_pre_header
      _
    $region3: #{tpu_custom_call.1} parent=1 // loop_header
      %s19 = sphi 0, %s23
      %p20 = scmp.ge.s32.totalorder %s19, 6
      %s29 = sphi 0, %s31
      %s32 = sphi 0, %s29
      %s33 = sphi 0, %s32
      %s49 = sphi 0, %s33
      %s53 = sphi 0, %s53
      %s55 = sphi 0, %s53
      %s56 = sphi 0, %s55
      %s70 = sphi 0, %s56
      %s74 = sphi 0, %s74
      %s76 = sphi 0, %s74
      %s77 = sphi 0, %s76
      %s91 = sphi 0, %s77
      %s95 = sphi 0, %s95
      %s97 = sphi 0, %s95
      %s98 = sphi 0, %s97
      %s112 = sphi 0, %s98
      %s116 = sphi 0, %s116
      %s118 = sphi 0, %s116
      %s119 = sphi 0, %s118
      %s133 = sphi 0, %s119
      %s139 = sphi 0, %s141
      %s142 = sphi 0, %s139
      %s143 = sphi 0, %s142
      %s159 = sphi 0, %s143
    $region4: #{tpu_custom_call.1} parent=1 // loop_header_branch
      %22 = sbr.rel (%p20) target = $region8
    $region5: #{tpu_custom_call.1} parent=1 // loop_body
      %s24 = ssub.s32 %s19, 1
      %s25 = ssub.s32 %s19, 2
      %s26 = sadd.s32 %s19, 1
      %s27 = ssub.s32 %s19, %s26
      %p28 = scmp.eq.s32.totalorder %s27, 0
      %s30 = sadd.s32 %s29, 1
      %s31 = scalar_select %p28, %s29, %s30
      %p34 = pneg %p28
      %p35 = scmp.eq.s32.totalorder %s19, 3
      %p36 = por %p34, %p35
      %p37 = scmp.ne.s32.totalorder %s29, %s32
      %p38 = scmp.eq.s32.totalorder %s19, 0
      %p39 = por %p37, %p38
      %p40 = scmp.ne.s32.totalorder %s29, %s32
      %p41 = scmp.eq.s32.totalorder %s24, 3
      %p42 = por %p40, %p41
      %p43 = scmp.ne.s32.totalorder %s32, %s33
      %p44 = scmp.eq.s32.totalorder %s24, 0
      %p45 = por %p43, %p44
      %p46 = scmp.ne.s32.totalorder %s32, %s33
      %p47 = scmp.eq.s32.totalorder %s25, 3
      %p48 = por %p46, %p47
      %p50 = scmp.ne.s32.totalorder %s33, %s49
      %p51 = scmp.eq.s32.totalorder %s25, 0
      %p52 = por %p50, %p51
      %s54 = sadd.s32 %s53, 1
      %p57 = scmp.eq.s32.totalorder %s19, 3
      %p58 = scmp.ne.s32.totalorder %s53, %s55
      %p59 = scmp.eq.s32.totalorder %s19, 0
      %p60 = por %p58, %p59
      %p61 = scmp.ne.s32.totalorder %s53, %s55
      %p62 = scmp.eq.s32.totalorder %s24, 3
      %p63 = por %p61, %p62
      %p64 = scmp.ne.s32.totalorder %s55, %s56
      %p65 = scmp.eq.s32.totalorder %s24, 0
      %p66 = por %p64, %p65
      %p67 = scmp.ne.s32.totalorder %s55, %s56
      %p68 = scmp.eq.s32.totalorder %s25, 3
      %p69 = por %p67, %p68
      %p71 = scmp.ne.s32.totalorder %s56, %s70
      %p72 = scmp.eq.s32.totalorder %s25, 0
      %p73 = por %p71, %p72
      %s75 = sadd.s32 %s74, 1
      %p78 = scmp.eq.s32.totalorder %s19, 3
      %p79 = scmp.ne.s32.totalorder %s74, %s76
      %p80 = scmp.eq.s32.totalorder %s19, 0
      %p81 = por %p79, %p80
      %p82 = scmp.ne.s32.totalorder %s74, %s76
      %p83 = scmp.eq.s32.totalorder %s24, 3
      %p84 = por %p82, %p83
      %p85 = scmp.ne.s32.totalorder %s76, %s77
      %p86 = scmp.eq.s32.totalorder %s24, 0
      %p87 = por %p85, %p86
      %p88 = scmp.ne.s32.totalorder %s76, %s77
      %p89 = scmp.eq.s32.totalorder %s25, 3
      %p90 = por %p88, %p89
      %p92 = scmp.ne.s32.totalorder %s77, %s91
      %p93 = scmp.eq.s32.totalorder %s25, 0
      %p94 = por %p92, %p93
      %s96 = sadd.s32 %s95, 1
      %p99 = scmp.eq.s32.totalorder %s19, 3
      %p100 = scmp.ne.s32.totalorder %s95, %s97
      %p101 = scmp.eq.s32.totalorder %s19, 0
      %p102 = por %p100, %p101
      %p103 = scmp.ne.s32.totalorder %s95, %s97
      %p104 = scmp.eq.s32.totalorder %s24, 3
      %p105 = por %p103, %p104
      %p106 = scmp.ne.s32.totalorder %s97, %s98
      %p107 = scmp.eq.s32.totalorder %s24, 0
      %p108 = por %p106, %p107
      %p109 = scmp.ne.s32.totalorder %s97, %s98
      %p110 = scmp.eq.s32.totalorder %s25, 3
      %p111 = por %p109, %p110
      %p113 = scmp.ne.s32.totalorder %s98, %s112
      %p114 = scmp.eq.s32.totalorder %s25, 0
      %p115 = por %p113, %p114
      %s117 = sadd.s32 %s116, 1
      %p120 = scmp.eq.s32.totalorder %s19, 3
      %p121 = scmp.ne.s32.totalorder %s116, %s118
      %p122 = scmp.eq.s32.totalorder %s19, 0
      %p123 = por %p121, %p122
      %p124 = scmp.ne.s32.totalorder %s116, %s118
      %p125 = scmp.eq.s32.totalorder %s24, 3
      %p126 = por %p124, %p125
      %p127 = scmp.ne.s32.totalorder %s118, %s119
      %p128 = scmp.eq.s32.totalorder %s24, 0
      %p129 = por %p127, %p128
      %p130 = scmp.ne.s32.totalorder %s118, %s119
      %p131 = scmp.eq.s32.totalorder %s25, 3
      %p132 = por %p130, %p131
      %p134 = scmp.ne.s32.totalorder %s119, %s133
      %p135 = scmp.eq.s32.totalorder %s25, 0
      %p136 = por %p134, %p135
      %s137 = ssub.s32 %s19, %s26
      %p138 = scmp.eq.s32.totalorder %s137, 0
      %s140 = sadd.s32 %s139, 1
      %s141 = scalar_select %p138, %s139, %s140
      %p144 = pneg %p138
      %p145 = scmp.eq.s32.totalorder %s19, 3
      %p146 = por %p144, %p145
      %p147 = scmp.ne.s32.totalorder %s139, %s142
      %p148 = scmp.eq.s32.totalorder %s19, 0
      %p149 = por %p147, %p148
      %p150 = scmp.ne.s32.totalorder %s139, %s142
      %p151 = scmp.eq.s32.totalorder %s24, 3
      %p152 = por %p150, %p151
      %p153 = scmp.ne.s32.totalorder %s142, %s143
      %p154 = scmp.eq.s32.totalorder %s24, 0
      %p155 = por %p153, %p154
      %p156 = scmp.ne.s32.totalorder %s142, %s143
      %p157 = scmp.eq.s32.totalorder %s25, 3
      %p158 = por %p156, %p157
      %p160 = scmp.ne.s32.totalorder %s143, %s159
      %p161 = scmp.eq.s32.totalorder %s25, 0
      %p162 = por %p160, %p161
      %p163 = scmp.le.s32.totalorder 1, %s19
      %p164 = scmp.lt.s32.totalorder %s19, 5
      %p165 = pnand %p163, %p164
      %p166 = pneg %p165
      // Predicated region
      $region9: #{tpu_custom_call.1} parent=5 // pred_check
        _
      $region10: #{tpu_custom_call.1} parent=5 // pred_check_branch
        %168 = sbr.rel (%p165) target = $region12
      $region11: #{tpu_custom_call.1} parent=5 // pred_region
        %s169 = ssub.s32 %s19, 1
        // Predicated region
        $region13: #{tpu_custom_call.1} parent=11 // pred_check
          %p170 = pneg %p66
        $region14: #{tpu_custom_call.1} parent=11 // pred_check_branch
          %172 = sbr.rel (%p170) target = $region16
        $region15: #{tpu_custom_call.1} parent=11 // pred_region
          %s174 = ssub.s32 16, 16
          %175 = vsyncadd [#allocation6], %s174
          %s177 = sshll.u32 [#allocation5], 4
          %s178 = int_to_ptr.vmem [resolvable:$true] %s177
          %180 = dma.hbm_to_vmem [thread:$0]  %s1, 16, %s178, [#allocation6]
        $region16: #{tpu_custom_call.1} parent=11 // pred_fallthru
          _
        // Predicated region
        $region17: #{tpu_custom_call.1} parent=11 // pred_check
          %p181 = pneg %p87
        $region18: #{tpu_custom_call.1} parent=11 // pred_check_branch
          %183 = sbr.rel (%p181) target = $region20
        $region19: #{tpu_custom_call.1} parent=11 // pred_region
          %s185 = ssub.s32 16, 16
          %186 = vsyncadd [#allocation6], %s185
          %s188 = sshll.u32 [#allocation7], 4
          %s189 = int_to_ptr.vmem [resolvable:$true] %s188
          %191 = dma.hbm_to_vmem [thread:$0]  %s2, 16, %s189, [#allocation6]
        $region20: #{tpu_custom_call.1} parent=11 // pred_fallthru
          _
        // Predicated region
        $region21: #{tpu_custom_call.1} parent=11 // pred_check
          %p192 = pneg %p108
        $region22: #{tpu_custom_call.1} parent=11 // pred_check_branch
          %194 = sbr.rel (%p192) target = $region24
        $region23: #{tpu_custom_call.1} parent=11 // pred_region
          %s196 = ssub.s32 1024, 1024
          %197 = vsyncadd [#allocation9], %s196
          %s198 = sshll.u32 [#allocation8], 4
          %s199 = int_to_ptr.vmem [resolvable:$true] %s198
          %204 = dma.hbm_to_vmem [thread:$0]  %s3, 1024, %s199, [#allocation9], 64, 64, 4
        $region24: #{tpu_custom_call.1} parent=11 // pred_fallthru
          _
        // Predicated region
        $region25: #{tpu_custom_call.1} parent=11 // pred_check
          %p205 = pneg %p129
        $region26: #{tpu_custom_call.1} parent=11 // pred_check_branch
          %207 = sbr.rel (%p205) target = $region28
        $region27: #{tpu_custom_call.1} parent=11 // pred_region
          %s209 = ssub.s32 16, 16
          %210 = vsyncadd [#allocation9], %s209
          %s212 = sshll.u32 [#allocation10], 4
          %s213 = int_to_ptr.vmem [resolvable:$true] %s212
          %215 = dma.hbm_to_vmem [thread:$0]  %s4, 16, %s213, [#allocation9]
        $region28: #{tpu_custom_call.1} parent=11 // pred_fallthru
          _
      $region12: #{tpu_custom_call.1} parent=5 // pred_fallthru
        _
      %p216 = scmp.lt.s32.totalorder %s19, 4
      // Predicated region
      $region29: #{tpu_custom_call.1} parent=5 // pred_check
        %p217 = pneg %p216
      $region30: #{tpu_custom_call.1} parent=5 // pred_check_branch
        %219 = sbr.rel (%p217) target = $region32
      $region31: #{tpu_custom_call.1} parent=5 // pred_region
        // Predicated region
        $region33: #{tpu_custom_call.1} parent=31 // pred_check
          %p220 = pneg %p39
        $region34: #{tpu_custom_call.1} parent=31 // pred_check_branch
          %222 = sbr.rel (%p220) target = $region36
        $region35: #{tpu_custom_call.1} parent=31 // pred_region
          %s223 = sand.u32 %s29, 1
          %s224 = scalar_lea.sflag [#allocation3], %s223
          %s225 = sand.u32 %s29, 1
          %s226 = smul.addr %s225, 256
          %s227 = scalar_lea.vmem [#allocation2], %s226
          %s228 = smul.u32 32, %s19
          %s230 = ssub.s32 4096, 4096
          %231 = vsyncadd %s224, %s230
          %s232 = smul.addr %s228, 128
          %s233 = scalar_lea.hbm %s0, %s232
          %s234 = sshll.u32 %s227, 4
          %s235 = int_to_ptr.vmem [resolvable:$true] %s234
          %240 = dma.hbm_to_vmem [thread:$0]  %s233, 4096, %s235, %s224, 128, 128, 8
        $region36: #{tpu_custom_call.1} parent=31 // pred_fallthru
          _
      $region32: #{tpu_custom_call.1} parent=5 // pred_fallthru
        _
      %p241 = scmp.le.s32.totalorder 1, %s19
      %p242 = scmp.lt.s32.totalorder %s19, 5
      %p243 = pnand %p241, %p242
      %p244 = pneg %p243
      // Predicated region
      $region37: #{tpu_custom_call.1} parent=5 // pred_check
        _
      $region38: #{tpu_custom_call.1} parent=5 // pred_check_branch
        %246 = sbr.rel (%p243) target = $region40
      $region39: #{tpu_custom_call.1} parent=5 // pred_region
        %s247 = ssub.s32 %s19, 1
        %s248 = sand.u32 %s32, 1
        %s249 = scalar_lea.sflag [#allocation3], %s248
        %s250 = sand.u32 %s32, 1
        %s251 = smul.addr %s250, 256
        %s252 = scalar_lea.vmem [#allocation2], %s251
        // Predicated region
        $region41: #{tpu_custom_call.1} parent=39 // pred_check
          %p253 = pneg %p45
        $region42: #{tpu_custom_call.1} parent=39 // pred_check_branch
          %255 = sbr.rel (%p253) target = $region44
        $region43: #{tpu_custom_call.1} parent=39 // pred_region
          %256 = dma.done %s249, 4096
        $region44: #{tpu_custom_call.1} parent=39 // pred_fallthru
          _
        // Predicated region
        $region45: #{tpu_custom_call.1} parent=39 // pred_check
          %p257 = pneg %p66
        $region46: #{tpu_custom_call.1} parent=39 // pred_check_branch
          %259 = sbr.rel (%p257) target = $region48
        $region47: #{tpu_custom_call.1} parent=39 // pred_region
          %260 = dma.done [#allocation6], 16
        $region48: #{tpu_custom_call.1} parent=39 // pred_fallthru
          _
        // Predicated region
        $region49: #{tpu_custom_call.1} parent=39 // pred_check
          %p261 = pneg %p87
        $region50: #{tpu_custom_call.1} parent=39 // pred_check_branch
          %263 = sbr.rel (%p261) target = $region52
        $region51: #{tpu_custom_call.1} parent=39 // pred_region
          %264 = dma.done [#allocation6], 16
        $region52: #{tpu_custom_call.1} parent=39 // pred_fallthru
          _
        // Predicated region
        $region53: #{tpu_custom_call.1} parent=39 // pred_check
          %p265 = pneg %p108
        $region54: #{tpu_custom_call.1} parent=39 // pred_check_branch
          %267 = sbr.rel (%p265) target = $region56
        $region55: #{tpu_custom_call.1} parent=39 // pred_region
          %268 = dma.done [#allocation9], 1024
        $region56: #{tpu_custom_call.1} parent=39 // pred_fallthru
          _
        // Predicated region
        $region57: #{tpu_custom_call.1} parent=39 // pred_check
          %p269 = pneg %p129
        $region58: #{tpu_custom_call.1} parent=39 // pred_check_branch
          %271 = sbr.rel (%p269) target = $region60
        $region59: #{tpu_custom_call.1} parent=39 // pred_region
          %272 = dma.done [#allocation9], 16
        $region60: #{tpu_custom_call.1} parent=39 // pred_fallthru
          _
        %s273 = sand.u32 %s32, 1
        %s274 = scalar_lea.sflag [#allocation3], %s273
        %s275 = sand.u32 %s32, 1
        %s276 = smul.addr %s275, 256
        %s277 = scalar_lea.vmem [#allocation2], %s276
        %p278 = pneg %p45
        %p279 = pneg %p42
        %p280 = pneg %p66
        %p281 = pneg %p63
        %p282 = pneg %p87
        %p283 = pneg %p84
        %p284 = pneg %p108
        %p285 = pneg %p105
        %p286 = pneg %p129
        %p287 = pneg %p126
        %p288 = pneg %p155
        %p289 = pneg %p152
        %s290 = sand.u32 %s142, 1
        %s291 = scalar_lea.sflag [#allocation4], %s290
        %s292 = sand.u32 %s142, 1
        %s293 = smul.addr %s292, 128
        %s294 = scalar_lea.vmem [#allocation11], %s293
        %s295 = smul.u32 32, %s24
        %s296 = smul.u32 32, %s24
        %v298 = vld [vmem:[%s252] sm:$0xff]
        %v299 = vld [vmem:[%s252 + $0x8] sm:$0xff]
        %v300 = vld [vmem:[%s252 + $0x10] sm:$0xff]
        %v301 = vld [vmem:[%s252 + $0x18] sm:$0xff]
        %v302 = vld [vmem:[%s252 + $0x20] sm:$0xff]
        %v303 = vld [vmem:[%s252 + $0x28] sm:$0xff]
        %v304 = vld [vmem:[%s252 + $0x30] sm:$0xff]
        %v305 = vld [vmem:[%s252 + $0x38] sm:$0xff]
        %v306 = vld [vmem:[%s252 + $0x40] sm:$0xff]
        %v307 = vld [vmem:[%s252 + $0x48] sm:$0xff]
        %v308 = vld [vmem:[%s252 + $0x50] sm:$0xff]
        %v309 = vld [vmem:[%s252 + $0x58] sm:$0xff]
        %v310 = vld [vmem:[%s252 + $0x60] sm:$0xff]
        %v311 = vld [vmem:[%s252 + $0x68] sm:$0xff]
        %v312 = vld [vmem:[%s252 + $0x70] sm:$0xff]
        %v313 = vld [vmem:[%s252 + $0x78] sm:$0xff]
        %v314 = vld [vmem:[%s252 + $0x80] sm:$0xff]
        %v315 = vld [vmem:[%s252 + $0x88] sm:$0xff]
        %v316 = vld [vmem:[%s252 + $0x90] sm:$0xff]
        %v317 = vld [vmem:[%s252 + $0x98] sm:$0xff]
        %v318 = vld [vmem:[%s252 + $0xa0] sm:$0xff]
        %v319 = vld [vmem:[%s252 + $0xa8] sm:$0xff]
        %v320 = vld [vmem:[%s252 + $0xb0] sm:$0xff]
        %v321 = vld [vmem:[%s252 + $0xb8] sm:$0xff]
        %v322 = vld [vmem:[%s252 + $0xc0] sm:$0xff]
        %v323 = vld [vmem:[%s252 + $0xc8] sm:$0xff]
        %v324 = vld [vmem:[%s252 + $0xd0] sm:$0xff]
        %v325 = vld [vmem:[%s252 + $0xd8] sm:$0xff]
        %v326 = vld [vmem:[%s252 + $0xe0] sm:$0xff]
        %v327 = vld [vmem:[%s252 + $0xe8] sm:$0xff]
        %v328 = vld [vmem:[%s252 + $0xf0] sm:$0xff]
        %v329 = vld [vmem:[%s252 + $0xf8] sm:$0xff]
        %330 = vadd.xlane.f32.xlu0 %v298
        %v331 = vpop.xlane.xlu0 %330
        %332 = vadd.xlane.f32.xlu0 %v299
        %v333 = vpop.xlane.xlu0 %332
        %334 = vadd.xlane.f32.xlu0 %v300
        %v335 = vpop.xlane.xlu0 %334
        %336 = vadd.xlane.f32.xlu0 %v301
        %v337 = vpop.xlane.xlu0 %336
        %338 = vadd.xlane.f32.xlu0 %v302
        %v339 = vpop.xlane.xlu0 %338
        %340 = vadd.xlane.f32.xlu0 %v303
        %v341 = vpop.xlane.xlu0 %340
        %342 = vadd.xlane.f32.xlu0 %v304
        %v343 = vpop.xlane.xlu0 %342
        %344 = vadd.xlane.f32.xlu0 %v305
        %v345 = vpop.xlane.xlu0 %344
        %346 = vadd.xlane.f32.xlu0 %v306
        %v347 = vpop.xlane.xlu0 %346
        %348 = vadd.xlane.f32.xlu0 %v307
        %v349 = vpop.xlane.xlu0 %348
        %350 = vadd.xlane.f32.xlu0 %v308
        %v351 = vpop.xlane.xlu0 %350
        %352 = vadd.xlane.f32.xlu0 %v309
        %v353 = vpop.xlane.xlu0 %352
        %354 = vadd.xlane.f32.xlu0 %v310
        %v355 = vpop.xlane.xlu0 %354
        %356 = vadd.xlane.f32.xlu0 %v311
        %v357 = vpop.xlane.xlu0 %356
        %358 = vadd.xlane.f32.xlu0 %v312
        %v359 = vpop.xlane.xlu0 %358
        %360 = vadd.xlane.f32.xlu0 %v313
        %v361 = vpop.xlane.xlu0 %360
        %362 = vadd.xlane.f32.xlu0 %v314
        %v363 = vpop.xlane.xlu0 %362
        %364 = vadd.xlane.f32.xlu0 %v315
        %v365 = vpop.xlane.xlu0 %364
        %366 = vadd.xlane.f32.xlu0 %v316
        %v367 = vpop.xlane.xlu0 %366
        %368 = vadd.xlane.f32.xlu0 %v317
        %v369 = vpop.xlane.xlu0 %368
        %370 = vadd.xlane.f32.xlu0 %v318
        %v371 = vpop.xlane.xlu0 %370
        %372 = vadd.xlane.f32.xlu0 %v319
        %v373 = vpop.xlane.xlu0 %372
        %374 = vadd.xlane.f32.xlu0 %v320
        %v375 = vpop.xlane.xlu0 %374
        %376 = vadd.xlane.f32.xlu0 %v321
        %v377 = vpop.xlane.xlu0 %376
        %378 = vadd.xlane.f32.xlu0 %v322
        %v379 = vpop.xlane.xlu0 %378
        %380 = vadd.xlane.f32.xlu0 %v323
        %v381 = vpop.xlane.xlu0 %380
        %382 = vadd.xlane.f32.xlu0 %v324
        %v383 = vpop.xlane.xlu0 %382
        %384 = vadd.xlane.f32.xlu0 %v325
        %v385 = vpop.xlane.xlu0 %384
        %386 = vadd.xlane.f32.xlu0 %v326
        %v387 = vpop.xlane.xlu0 %386
        %388 = vadd.xlane.f32.xlu0 %v327
        %v389 = vpop.xlane.xlu0 %388
        %390 = vadd.xlane.f32.xlu0 %v328
        %v391 = vpop.xlane.xlu0 %390
        %392 = vadd.xlane.f32.xlu0 %v329
        %v393 = vpop.xlane.xlu0 %392
        %v394 = vrcp.pop 128.0
        %v395 = vmul.f32 %v331, %v394
        %v396 = vmul.f32 %v333, %v394
        %v397 = vmul.f32 %v335, %v394
        %v398 = vmul.f32 %v337, %v394
        %v399 = vmul.f32 %v339, %v394
        %v400 = vmul.f32 %v341, %v394
        %v401 = vmul.f32 %v343, %v394
        %v402 = vmul.f32 %v345, %v394
        %v403 = vmul.f32 %v347, %v394
        %v404 = vmul.f32 %v349, %v394
        %v405 = vmul.f32 %v351, %v394
        %v406 = vmul.f32 %v353, %v394
        %v407 = vmul.f32 %v355, %v394
        %v408 = vmul.f32 %v357, %v394
        %v409 = vmul.f32 %v359, %v394
        %v410 = vmul.f32 %v361, %v394
        %v411 = vmul.f32 %v363, %v394
        %v412 = vmul.f32 %v365, %v394
        %v413 = vmul.f32 %v367, %v394
        %v414 = vmul.f32 %v369, %v394
        %v415 = vmul.f32 %v371, %v394
        %v416 = vmul.f32 %v373, %v394
        %v417 = vmul.f32 %v375, %v394
        %v418 = vmul.f32 %v377, %v394
        %v419 = vmul.f32 %v379, %v394
        %v420 = vmul.f32 %v381, %v394
        %v421 = vmul.f32 %v383, %v394
        %v422 = vmul.f32 %v385, %v394
        %v423 = vmul.f32 %v387, %v394
        %v424 = vmul.f32 %v389, %v394
        %v425 = vmul.f32 %v391, %v394
        %v426 = vmul.f32 %v393, %v394
        %v427 = vsub.f32 %v298, %v395
        %v428 = vsub.f32 %v299, %v396
        %v429 = vsub.f32 %v300, %v397
        %v430 = vsub.f32 %v301, %v398
        %v431 = vsub.f32 %v302, %v399
        %v432 = vsub.f32 %v303, %v400
        %v433 = vsub.f32 %v304, %v401
        %v434 = vsub.f32 %v305, %v402
        %v435 = vsub.f32 %v306, %v403
        %v436 = vsub.f32 %v307, %v404
        %v437 = vsub.f32 %v308, %v405
        %v438 = vsub.f32 %v309, %v406
        %v439 = vsub.f32 %v310, %v407
        %v440 = vsub.f32 %v311, %v408
        %v441 = vsub.f32 %v312, %v409
        %v442 = vsub.f32 %v313, %v410
        %v443 = vsub.f32 %v314, %v411
        %v444 = vsub.f32 %v315, %v412
        %v445 = vsub.f32 %v316, %v413
        %v446 = vsub.f32 %v317, %v414
        %v447 = vsub.f32 %v318, %v415
        %v448 = vsub.f32 %v319, %v416
        %v449 = vsub.f32 %v320, %v417
        %v450 = vsub.f32 %v321, %v418
        %v451 = vsub.f32 %v322, %v419
        %v452 = vsub.f32 %v323, %v420
        %v453 = vsub.f32 %v324, %v421
        %v454 = vsub.f32 %v325, %v422
        %v455 = vsub.f32 %v326, %v423
        %v456 = vsub.f32 %v327, %v424
        %v457 = vsub.f32 %v328, %v425
        %v458 = vsub.f32 %v329, %v426
        %v459 = vmul.f32 %v427, %v427
        %v460 = vmul.f32 %v428, %v428
        %v461 = vmul.f32 %v429, %v429
        %v462 = vmul.f32 %v430, %v430
        %v463 = vmul.f32 %v431, %v431
        %v464 = vmul.f32 %v432, %v432
        %v465 = vmul.f32 %v433, %v433
        %v466 = vmul.f32 %v434, %v434
        %v467 = vmul.f32 %v435, %v435
        %v468 = vmul.f32 %v436, %v436
        %v469 = vmul.f32 %v437, %v437
        %v470 = vmul.f32 %v438, %v438
        %v471 = vmul.f32 %v439, %v439
        %v472 = vmul.f32 %v440, %v440
        %v473 = vmul.f32 %v441, %v441
        %v474 = vmul.f32 %v442, %v442
        %v475 = vmul.f32 %v443, %v443
        %v476 = vmul.f32 %v444, %v444
        %v477 = vmul.f32 %v445, %v445
        %v478 = vmul.f32 %v446, %v446
        %v479 = vmul.f32 %v447, %v447
        %v480 = vmul.f32 %v448, %v448
        %v481 = vmul.f32 %v449, %v449
        %v482 = vmul.f32 %v450, %v450
        %v483 = vmul.f32 %v451, %v451
        %v484 = vmul.f32 %v452, %v452
        %v485 = vmul.f32 %v453, %v453
        %v486 = vmul.f32 %v454, %v454
        %v487 = vmul.f32 %v455, %v455
        %v488 = vmul.f32 %v456, %v456
        %v489 = vmul.f32 %v457, %v457
        %v490 = vmul.f32 %v458, %v458
        %491 = vadd.xlane.f32.xlu0 %v459
        %v492 = vpop.xlane.xlu0 %491
        %493 = vadd.xlane.f32.xlu0 %v460
        %v494 = vpop.xlane.xlu0 %493
        %495 = vadd.xlane.f32.xlu0 %v461
        %v496 = vpop.xlane.xlu0 %495
        %497 = vadd.xlane.f32.xlu0 %v462
        %v498 = vpop.xlane.xlu0 %497
        %499 = vadd.xlane.f32.xlu0 %v463
        %v500 = vpop.xlane.xlu0 %499
        %501 = vadd.xlane.f32.xlu0 %v464
        %v502 = vpop.xlane.xlu0 %501
        %503 = vadd.xlane.f32.xlu0 %v465
        %v504 = vpop.xlane.xlu0 %503
        %505 = vadd.xlane.f32.xlu0 %v466
        %v506 = vpop.xlane.xlu0 %505
        %507 = vadd.xlane.f32.xlu0 %v467
        %v508 = vpop.xlane.xlu0 %507
        %509 = vadd.xlane.f32.xlu0 %v468
        %v510 = vpop.xlane.xlu0 %509
        %511 = vadd.xlane.f32.xlu0 %v469
        %v512 = vpop.xlane.xlu0 %511
        %513 = vadd.xlane.f32.xlu0 %v470
        %v514 = vpop.xlane.xlu0 %513
        %515 = vadd.xlane.f32.xlu0 %v471
        %v516 = vpop.xlane.xlu0 %515
        %517 = vadd.xlane.f32.xlu0 %v472
        %v518 = vpop.xlane.xlu0 %517
        %519 = vadd.xlane.f32.xlu0 %v473
        %v520 = vpop.xlane.xlu0 %519
        %521 = vadd.xlane.f32.xlu0 %v474
        %v522 = vpop.xlane.xlu0 %521
        %523 = vadd.xlane.f32.xlu0 %v475
        %v524 = vpop.xlane.xlu0 %523
        %525 = vadd.xlane.f32.xlu0 %v476
        %v526 = vpop.xlane.xlu0 %525
        %527 = vadd.xlane.f32.xlu0 %v477
        %v528 = vpop.xlane.xlu0 %527
        %529 = vadd.xlane.f32.xlu0 %v478
        %v530 = vpop.xlane.xlu0 %529
        %531 = vadd.xlane.f32.xlu0 %v479
        %v532 = vpop.xlane.xlu0 %531
        %533 = vadd.xlane.f32.xlu0 %v480
        %v534 = vpop.xlane.xlu0 %533
        %535 = vadd.xlane.f32.xlu0 %v481
        %v536 = vpop.xlane.xlu0 %535
        %537 = vadd.xlane.f32.xlu0 %v482
        %v538 = vpop.xlane.xlu0 %537
        %539 = vadd.xlane.f32.xlu0 %v483
        %v540 = vpop.xlane.xlu0 %539
        %541 = vadd.xlane.f32.xlu0 %v484
        %v542 = vpop.xlane.xlu0 %541
        %543 = vadd.xlane.f32.xlu0 %v485
        %v544 = vpop.xlane.xlu0 %543
        %545 = vadd.xlane.f32.xlu0 %v486
        %v546 = vpop.xlane.xlu0 %545
        %547 = vadd.xlane.f32.xlu0 %v487
        %v548 = vpop.xlane.xlu0 %547
        %549 = vadd.xlane.f32.xlu0 %v488
        %v550 = vpop.xlane.xlu0 %549
        %551 = vadd.xlane.f32.xlu0 %v489
        %v552 = vpop.xlane.xlu0 %551
        %553 = vadd.xlane.f32.xlu0 %v490
        %v554 = vpop.xlane.xlu0 %553
        %v555 = vmul.f32 %v492, %v394
        %v556 = vmul.f32 %v494, %v394
        %v557 = vmul.f32 %v496, %v394
        %v558 = vmul.f32 %v498, %v394
        %v559 = vmul.f32 %v500, %v394
        %v560 = vmul.f32 %v502, %v394
        %v561 = vmul.f32 %v504, %v394
        %v562 = vmul.f32 %v506, %v394
        %v563 = vmul.f32 %v508, %v394
        %v564 = vmul.f32 %v510, %v394
        %v565 = vmul.f32 %v512, %v394
        %v566 = vmul.f32 %v514, %v394
        %v567 = vmul.f32 %v516, %v394
        %v568 = vmul.f32 %v518, %v394
        %v569 = vmul.f32 %v520, %v394
        %v570 = vmul.f32 %v522, %v394
        %v571 = vmul.f32 %v524, %v394
        %v572 = vmul.f32 %v526, %v394
        %v573 = vmul.f32 %v528, %v394
        %v574 = vmul.f32 %v530, %v394
        %v575 = vmul.f32 %v532, %v394
        %v576 = vmul.f32 %v534, %v394
        %v577 = vmul.f32 %v536, %v394
        %v578 = vmul.f32 %v538, %v394
        %v579 = vmul.f32 %v540, %v394
        %v580 = vmul.f32 %v542, %v394
        %v581 = vmul.f32 %v544, %v394
        %v582 = vmul.f32 %v546, %v394
        %v583 = vmul.f32 %v548, %v394
        %v584 = vmul.f32 %v550, %v394
        %v585 = vmul.f32 %v552, %v394
        %v586 = vmul.f32 %v554, %v394
        %v587 = vadd.f32 %v555, 1e-05
        %v588 = vadd.f32 %v556, 1e-05
        %v589 = vadd.f32 %v557, 1e-05
        %v590 = vadd.f32 %v558, 1e-05
        %v591 = vadd.f32 %v559, 1e-05
        %v592 = vadd.f32 %v560, 1e-05
        %v593 = vadd.f32 %v561, 1e-05
        %v594 = vadd.f32 %v562, 1e-05
        %v595 = vadd.f32 %v563, 1e-05
        %v596 = vadd.f32 %v564, 1e-05
        %v597 = vadd.f32 %v565, 1e-05
        %v598 = vadd.f32 %v566, 1e-05
        %v599 = vadd.f32 %v567, 1e-05
        %v600 = vadd.f32 %v568, 1e-05
        %v601 = vadd.f32 %v569, 1e-05
        %v602 = vadd.f32 %v570, 1e-05
        %v603 = vadd.f32 %v571, 1e-05
        %v604 = vadd.f32 %v572, 1e-05
        %v605 = vadd.f32 %v573, 1e-05
        %v606 = vadd.f32 %v574, 1e-05
        %v607 = vadd.f32 %v575, 1e-05
        %v608 = vadd.f32 %v576, 1e-05
        %v609 = vadd.f32 %v577, 1e-05
        %v610 = vadd.f32 %v578, 1e-05
        %v611 = vadd.f32 %v579, 1e-05
        %v612 = vadd.f32 %v580, 1e-05
        %v613 = vadd.f32 %v581, 1e-05
        %v614 = vadd.f32 %v582, 1e-05
        %v615 = vadd.f32 %v583, 1e-05
        %v616 = vadd.f32 %v584, 1e-05
        %v617 = vadd.f32 %v585, 1e-05
        %v618 = vadd.f32 %v586, 1e-05
        %v619 = vrsqrt.pop %v587
        %v620 = vrsqrt.pop %v588
        %v621 = vrsqrt.pop %v589
        %v622 = vrsqrt.pop %v590
        %v623 = vrsqrt.pop %v591
        %v624 = vrsqrt.pop %v592
        %v625 = vrsqrt.pop %v593
        %v626 = vrsqrt.pop %v594
        %v627 = vrsqrt.pop %v595
        %v628 = vrsqrt.pop %v596
        %v629 = vrsqrt.pop %v597
        %v630 = vrsqrt.pop %v598
        %v631 = vrsqrt.pop %v599
        %v632 = vrsqrt.pop %v600
        %v633 = vrsqrt.pop %v601
        %v634 = vrsqrt.pop %v602
        %v635 = vrsqrt.pop %v603
        %v636 = vrsqrt.pop %v604
        %v637 = vrsqrt.pop %v605
        %v638 = vrsqrt.pop %v606
        %v639 = vrsqrt.pop %v607
        %v640 = vrsqrt.pop %v608
        %v641 = vrsqrt.pop %v609
        %v642 = vrsqrt.pop %v610
        %v643 = vrsqrt.pop %v611
        %v644 = vrsqrt.pop %v612
        %v645 = vrsqrt.pop %v613
        %v646 = vrsqrt.pop %v614
        %v647 = vrsqrt.pop %v615
        %v648 = vrsqrt.pop %v616
        %v649 = vrsqrt.pop %v617
        %v650 = vrsqrt.pop %v618
        %v651 = vmul.f32 %v427, %v619
        %v652 = vmul.f32 %v428, %v620
        %v653 = vmul.f32 %v429, %v621
        %v654 = vmul.f32 %v430, %v622
        %v655 = vmul.f32 %v431, %v623
        %v656 = vmul.f32 %v432, %v624
        %v657 = vmul.f32 %v433, %v625
        %v658 = vmul.f32 %v434, %v626
        %v659 = vmul.f32 %v435, %v627
        %v660 = vmul.f32 %v436, %v628
        %v661 = vmul.f32 %v437, %v629
        %v662 = vmul.f32 %v438, %v630
        %v663 = vmul.f32 %v439, %v631
        %v664 = vmul.f32 %v440, %v632
        %v665 = vmul.f32 %v441, %v633
        %v666 = vmul.f32 %v442, %v634
        %v667 = vmul.f32 %v443, %v635
        %v668 = vmul.f32 %v444, %v636
        %v669 = vmul.f32 %v445, %v637
        %v670 = vmul.f32 %v446, %v638
        %v671 = vmul.f32 %v447, %v639
        %v672 = vmul.f32 %v448, %v640
        %v673 = vmul.f32 %v449, %v641
        %v674 = vmul.f32 %v450, %v642
        %v675 = vmul.f32 %v451, %v643
        %v676 = vmul.f32 %v452, %v644
        %v677 = vmul.f32 %v453, %v645
        %v678 = vmul.f32 %v454, %v646
        %v679 = vmul.f32 %v455, %v647
        %v680 = vmul.f32 %v456, %v648
        %v681 = vmul.f32 %v457, %v649
        %v682 = vmul.f32 %v458, %v650
        %v683 = vld [vmem:[#allocation5] sm:$0x1]
        %v685 = vlaneseq
        %v686 = vshrl.u32 %v685, 7
        %v687 = vsub.s32 0, %v686
        %v688 = vrot.slane %v683, %v687
        %v690 = vmul.f32 %v651, %v688
        %v691 = vmul.f32 %v652, %v688
        %v692 = vmul.f32 %v653, %v688
        %v693 = vmul.f32 %v654, %v688
        %v694 = vmul.f32 %v655, %v688
        %v695 = vmul.f32 %v656, %v688
        %v696 = vmul.f32 %v657, %v688
        %v697 = vmul.f32 %v658, %v688
        %v698 = vmul.f32 %v659, %v688
        %v699 = vmul.f32 %v660, %v688
        %v700 = vmul.f32 %v661, %v688
        %v701 = vmul.f32 %v662, %v688
        %v702 = vmul.f32 %v663, %v688
        %v703 = vmul.f32 %v664, %v688
        %v704 = vmul.f32 %v665, %v688
        %v705 = vmul.f32 %v666, %v688
        %v706 = vmul.f32 %v667, %v688
        %v707 = vmul.f32 %v668, %v688
        %v708 = vmul.f32 %v669, %v688
        %v709 = vmul.f32 %v670, %v688
        %v710 = vmul.f32 %v671, %v688
        %v711 = vmul.f32 %v672, %v688
        %v712 = vmul.f32 %v673, %v688
        %v713 = vmul.f32 %v674, %v688
        %v714 = vmul.f32 %v675, %v688
        %v715 = vmul.f32 %v676, %v688
        %v716 = vmul.f32 %v677, %v688
        %v717 = vmul.f32 %v678, %v688
        %v718 = vmul.f32 %v679, %v688
        %v719 = vmul.f32 %v680, %v688
        %v720 = vmul.f32 %v681, %v688
        %v721 = vmul.f32 %v682, %v688
        %v722 = vld [vmem:[#allocation7] sm:$0x1]
        %v724 = vlaneseq
        %v725 = vshrl.u32 %v724, 7
        %v726 = vsub.s32 0, %v725
        %v727 = vrot.slane %v722, %v726
        %v729 = vadd.f32 %v690, %v727
        %v730 = vadd.f32 %v691, %v727
        %v731 = vadd.f32 %v692, %v727
        %v732 = vadd.f32 %v693, %v727
        %v733 = vadd.f32 %v694, %v727
        %v734 = vadd.f32 %v695, %v727
        %v735 = vadd.f32 %v696, %v727
        %v736 = vadd.f32 %v697, %v727
        %v737 = vadd.f32 %v698, %v727
        %v738 = vadd.f32 %v699, %v727
        %v739 = vadd.f32 %v700, %v727
        %v740 = vadd.f32 %v701, %v727
        %v741 = vadd.f32 %v702, %v727
        %v742 = vadd.f32 %v703, %v727
        %v743 = vadd.f32 %v704, %v727
        %v744 = vadd.f32 %v705, %v727
        %v745 = vadd.f32 %v706, %v727
        %v746 = vadd.f32 %v707, %v727
        %v747 = vadd.f32 %v708, %v727
        %v748 = vadd.f32 %v709, %v727
        %v749 = vadd.f32 %v710, %v727
        %v750 = vadd.f32 %v711, %v727
        %v751 = vadd.f32 %v712, %v727
        %v752 = vadd.f32 %v713, %v727
        %v753 = vadd.f32 %v714, %v727
        %v754 = vadd.f32 %v715, %v727
        %v755 = vadd.f32 %v716, %v727
        %v756 = vadd.f32 %v717, %v727
        %v757 = vadd.f32 %v718, %v727
        %v758 = vadd.f32 %v719, %v727
        %v759 = vadd.f32 %v720, %v727
        %v760 = vadd.f32 %v721, %v727
        %v761 = vpack.c.bf16 %v730, %v729
        %v762 = vpack.c.bf16 %v732, %v731
        %v763 = vpack.c.bf16 %v734, %v733
        %v764 = vpack.c.bf16 %v736, %v735
        %v765 = vpack.c.bf16 %v738, %v737
        %v766 = vpack.c.bf16 %v740, %v739
        %v767 = vpack.c.bf16 %v742, %v741
        %v768 = vpack.c.bf16 %v744, %v743
        %v769 = vpack.c.bf16 %v746, %v745
        %v770 = vpack.c.bf16 %v748, %v747
        %v771 = vpack.c.bf16 %v750, %v749
        %v772 = vpack.c.bf16 %v752, %v751
        %v773 = vpack.c.bf16 %v754, %v753
        %v774 = vpack.c.bf16 %v756, %v755
        %v775 = vpack.c.bf16 %v758, %v757
        %v776 = vpack.c.bf16 %v760, %v759
        %v777 = vld [vmem:[#allocation8] sm:$0xf]
        %v778 = vld [vmem:[#allocation8 + $0x4] sm:$0xf]
        %v779 = vld [vmem:[#allocation8 + $0x8] sm:$0xf]
        %v780 = vld [vmem:[#allocation8 + $0xc] sm:$0xf]
        %v781 = vld [vmem:[#allocation8 + $0x10] sm:$0xf]
        %v782 = vld [vmem:[#allocation8 + $0x14] sm:$0xf]
        %v783 = vld [vmem:[#allocation8 + $0x18] sm:$0xf]
        %v784 = vld [vmem:[#allocation8 + $0x1c] sm:$0xf]
        %v785 = vld [vmem:[#allocation8 + $0x20] sm:$0xf]
        %v786 = vld [vmem:[#allocation8 + $0x24] sm:$0xf]
        %v787 = vld [vmem:[#allocation8 + $0x28] sm:$0xf]
        %v788 = vld [vmem:[#allocation8 + $0x2c] sm:$0xf]
        %v789 = vld [vmem:[#allocation8 + $0x30] sm:$0xf]
        %v790 = vld [vmem:[#allocation8 + $0x34] sm:$0xf]
        %v791 = vld [vmem:[#allocation8 + $0x38] sm:$0xf]
        %v792 = vld [vmem:[#allocation8 + $0x3c] sm:$0xf]
        %v793 = vld [vmem:[#allocation10] sm:$0x1]
        %v795 = vlaneseq
        %v796 = vshrl.u32 %v795, 7
        %v797 = vsub.s32 0, %v796
        %v798 = vrot.slane %v793, %v797
        %v816 = vunpack.c.l.b16 %v777
        %v817 = vunpack.c.l.b16 %v778
        %v818 = vunpack.c.l.b16 %v779
        %v819 = vunpack.c.l.b16 %v780
        %v820 = vunpack.c.l.b16 %v781
        %v821 = vunpack.c.l.b16 %v782
        %v822 = vunpack.c.l.b16 %v783
        %v823 = vunpack.c.l.b16 %v784
        %v824 = vunpack.c.l.b16 %v785
        %v825 = vunpack.c.l.b16 %v786
        %v826 = vunpack.c.l.b16 %v787
        %v827 = vunpack.c.l.b16 %v788
        %v828 = vunpack.c.l.b16 %v789
        %v829 = vunpack.c.l.b16 %v790
        %v830 = vunpack.c.l.b16 %v791
        %v831 = vunpack.c.l.b16 %v792
        %v832 = vpack.c.b16 %v817, %v816
        %v833 = vpack.c.b16 %v819, %v818
        %v834 = vpack.c.b16 %v821, %v820
        %v835 = vpack.c.b16 %v823, %v822
        %v836 = vpack.c.b16 %v825, %v824
        %v837 = vpack.c.b16 %v827, %v826
        %v838 = vpack.c.b16 %v829, %v828
        %v839 = vpack.c.b16 %v831, %v830
        %848 = vmatprep.subr.bf16.mxu0 0
        %849 = vmatpush1.bf16.msra.mxu0 %v832
        %850 = vmatprep.subr.bf16.mxu0 0
        %851 = vmatpush1.bf16.msra.mxu0 %v833
        %852 = vmatprep.subr.bf16.mxu0 0
        %853 = vmatpush1.bf16.msra.mxu0 %v834
        %854 = vmatprep.subr.bf16.mxu0 0
        %855 = vmatpush1.bf16.msra.mxu0 %v835
        %856 = vmatprep.subr.bf16.mxu0 0
        %857 = vmatpush1.bf16.msra.mxu0 %v836
        %858 = vmatprep.subr.bf16.mxu0 0
        %859 = vmatpush1.bf16.msra.mxu0 %v837
        %860 = vmatprep.subr.bf16.mxu0 0
        %861 = vmatpush1.bf16.msra.mxu0 %v838
        %862 = vmatprep.subr.bf16.mxu0 0
        %863 = vmatpush1.bf16.msra.mxu0 %v839
        %864 = vmatprep.subr.bf16.mxu0 0
        %865 = vmatpush1.bf16.msra.mxu0 0
        %866 = vmatprep.subr.bf16.mxu0 0
        %867 = vmatpush1.bf16.msra.mxu0 0
        %868 = vmatprep.subr.bf16.mxu0 0
        %869 = vmatpush1.bf16.msra.mxu0 0
        %870 = vmatprep.subr.bf16.mxu0 0
        %871 = vmatpush1.bf16.msra.mxu0 0
        %872 = vmatprep.subr.bf16.mxu0 0
        %873 = vmatpush1.bf16.msra.mxu0 0
        %874 = vmatprep.subr.bf16.mxu0 0
        %875 = vmatpush1.bf16.msra.mxu0 0
        %876 = vmatprep.subr.bf16.mxu0 0
        %877 = vmatpush1.bf16.msra.mxu0 0
        %878 = vmatprep.subr.bf16.mxu0 0
        %879 = vmatpush1.bf16.msra.mxu0 0
        %880 = vmatprep.mubr.bf16.mxu0 0
        %881 = vmatmul.mubr.bf16.gmra.mrb[0].mxu0 %v761
        %v882 = vpop.f32.mrb[0].mxu0
        %v883 = vadd.f32 %v798, %v882
        %v884 = vpop.f32.mrb[0].mxu0
        %v885 = vpop.f32.mrb[0].mxu0
        %v886 = vadd.f32 %v798, %v885
        %v887 = vpop.f32.mrb[0].mxu0
        %888 = vmatprep.mubr.bf16.mxu0 0
        %889 = vmatmul.mubr.bf16.gmra.mrb[0].mxu0 %v762
        %v890 = vpop.f32.mrb[0].mxu0
        %v891 = vadd.f32 %v798, %v890
        %v892 = vpop.f32.mrb[0].mxu0
        %v893 = vpop.f32.mrb[0].mxu0
        %v894 = vadd.f32 %v798, %v893
        %v895 = vpop.f32.mrb[0].mxu0
        %896 = vmatprep.mubr.bf16.mxu0 0
        %897 = vmatmul.mubr.bf16.gmra.mrb[0].mxu0 %v763
        %v898 = vpop.f32.mrb[0].mxu0
        %v899 = vadd.f32 %v798, %v898
        %v900 = vpop.f32.mrb[0].mxu0
        %v901 = vpop.f32.mrb[0].mxu0
        %v902 = vadd.f32 %v798, %v901
        %v903 = vpop.f32.mrb[0].mxu0
        %904 = vmatprep.mubr.bf16.mxu0 0
        %905 = vmatmul.mubr.bf16.gmra.mrb[0].mxu0 %v764
        %v906 = vpop.f32.mrb[0].mxu0
        %v907 = vadd.f32 %v798, %v906
        %v908 = vpop.f32.mrb[0].mxu0
        %v909 = vpop.f32.mrb[0].mxu0
        %v910 = vadd.f32 %v798, %v909
        %v911 = vpop.f32.mrb[0].mxu0
        %912 = vmatprep.mubr.bf16.mxu0 0
        %913 = vmatmul.mubr.bf16.gmra.mrb[0].mxu0 %v765
        %v914 = vpop.f32.mrb[0].mxu0
        %v915 = vadd.f32 %v798, %v914
        %v916 = vpop.f32.mrb[0].mxu0
        %v917 = vpop.f32.mrb[0].mxu0
        %v918 = vadd.f32 %v798, %v917
        %v919 = vpop.f32.mrb[0].mxu0
        %920 = vmatprep.mubr.bf16.mxu0 0
        %921 = vmatmul.mubr.bf16.gmra.mrb[0].mxu0 %v766
        %v922 = vpop.f32.mrb[0].mxu0
        %v923 = vadd.f32 %v798, %v922
        %v924 = vpop.f32.mrb[0].mxu0
        %v925 = vpop.f32.mrb[0].mxu0
        %v926 = vadd.f32 %v798, %v925
        %v927 = vpop.f32.mrb[0].mxu0
        %928 = vmatprep.mubr.bf16.mxu0 0
        %929 = vmatmul.mubr.bf16.gmra.mrb[0].mxu0 %v767
        %v930 = vpop.f32.mrb[0].mxu0
        %v931 = vadd.f32 %v798, %v930
        %v932 = vpop.f32.mrb[0].mxu0
        %v933 = vpop.f32.mrb[0].mxu0
        %v934 = vadd.f32 %v798, %v933
        %v935 = vpop.f32.mrb[0].mxu0
        %936 = vmatprep.mubr.bf16.mxu0 0
        %937 = vmatmul.mubr.bf16.gmra.mrb[0].mxu0 %v768
        %v938 = vpop.f32.mrb[0].mxu0
        %v939 = vadd.f32 %v798, %v938
        %v940 = vpop.f32.mrb[0].mxu0
        %v941 = vpop.f32.mrb[0].mxu0
        %v942 = vadd.f32 %v798, %v941
        %v943 = vpop.f32.mrb[0].mxu0
        %944 = vmatprep.mubr.bf16.mxu0 0
        %945 = vmatmul.mubr.bf16.gmra.mrb[0].mxu0 %v769
        %v946 = vpop.f32.mrb[0].mxu0
        %v947 = vadd.f32 %v798, %v946
        %v948 = vpop.f32.mrb[0].mxu0
        %v949 = vpop.f32.mrb[0].mxu0
        %v950 = vadd.f32 %v798, %v949
        %v951 = vpop.f32.mrb[0].mxu0
        %952 = vmatprep.mubr.bf16.mxu0 0
        %953 = vmatmul.mubr.bf16.gmra.mrb[0].mxu0 %v770
        %v954 = vpop.f32.mrb[0].mxu0
        %v955 = vadd.f32 %v798, %v954
        %v956 = vpop.f32.mrb[0].mxu0
        %v957 = vpop.f32.mrb[0].mxu0
        %v958 = vadd.f32 %v798, %v957
        %v959 = vpop.f32.mrb[0].mxu0
        %960 = vmatprep.mubr.bf16.mxu0 0
        %961 = vmatmul.mubr.bf16.gmra.mrb[0].mxu0 %v771
        %v962 = vpop.f32.mrb[0].mxu0
        %v963 = vadd.f32 %v798, %v962
        %v964 = vpop.f32.mrb[0].mxu0
        %v965 = vpop.f32.mrb[0].mxu0
        %v966 = vadd.f32 %v798, %v965
        %v967 = vpop.f32.mrb[0].mxu0
        %968 = vmatprep.mubr.bf16.mxu0 0
        %969 = vmatmul.mubr.bf16.gmra.mrb[0].mxu0 %v772
        %v970 = vpop.f32.mrb[0].mxu0
        %v971 = vadd.f32 %v798, %v970
        %v972 = vpop.f32.mrb[0].mxu0
        %v973 = vpop.f32.mrb[0].mxu0
        %v974 = vadd.f32 %v798, %v973
        %v975 = vpop.f32.mrb[0].mxu0
        %976 = vmatprep.mubr.bf16.mxu0 0
        %977 = vmatmul.mubr.bf16.gmra.mrb[0].mxu0 %v773
        %v978 = vpop.f32.mrb[0].mxu0
        %v979 = vadd.f32 %v798, %v978
        %v980 = vpop.f32.mrb[0].mxu0
        %v981 = vpop.f32.mrb[0].mxu0
        %v982 = vadd.f32 %v798, %v981
        %v983 = vpop.f32.mrb[0].mxu0
        %984 = vmatprep.mubr.bf16.mxu0 0
        %985 = vmatmul.mubr.bf16.gmra.mrb[0].mxu0 %v774
        %v986 = vpop.f32.mrb[0].mxu0
        %v987 = vadd.f32 %v798, %v986
        %v988 = vpop.f32.mrb[0].mxu0
        %v989 = vpop.f32.mrb[0].mxu0
        %v990 = vadd.f32 %v798, %v989
        %v991 = vpop.f32.mrb[0].mxu0
        %992 = vmatprep.mubr.bf16.mxu0 0
        %993 = vmatmul.mubr.bf16.gmra.mrb[0].mxu0 %v775
        %v994 = vpop.f32.mrb[0].mxu0
        %v995 = vadd.f32 %v798, %v994
        %v996 = vpop.f32.mrb[0].mxu0
        %v997 = vpop.f32.mrb[0].mxu0
        %v998 = vadd.f32 %v798, %v997
        %v999 = vpop.f32.mrb[0].mxu0
        %1000 = vmatprep.mubr.bf16.mxu0 0
        %1001 = vmatmul.mubr.bf16.gmra.mrb[0].mxu0 %v776
        %v1002 = vpop.f32.mrb[0].mxu0
        %v1003 = vadd.f32 %v798, %v1002
        %v1004 = vpop.f32.mrb[0].mxu0
        %v1005 = vpop.f32.mrb[0].mxu0
        %v1006 = vadd.f32 %v798, %v1005
        %v1007 = vpop.f32.mrb[0].mxu0
        %1008 = vdwg.mxu0
        %v1009 = vpack.c.bf16 %v886, %v883
        %v1010 = vpack.c.bf16 %v894, %v891
        %v1011 = vpack.c.bf16 %v902, %v899
        %v1012 = vpack.c.bf16 %v910, %v907
        %v1013 = vpack.c.bf16 %v918, %v915
        %v1014 = vpack.c.bf16 %v926, %v923
        %v1015 = vpack.c.bf16 %v934, %v931
        %v1016 = vpack.c.bf16 %v942, %v939
        %v1017 = vpack.c.bf16 %v950, %v947
        %v1018 = vpack.c.bf16 %v958, %v955
        %v1019 = vpack.c.bf16 %v966, %v963
        %v1020 = vpack.c.bf16 %v974, %v971
        %v1021 = vpack.c.bf16 %v982, %v979
        %v1022 = vpack.c.bf16 %v990, %v987
        %v1023 = vpack.c.bf16 %v998, %v995
        %v1024 = vpack.c.bf16 %v1006, %v1003
        %v1025 = vtanh.bf16.pop %v1009
        %v1026 = vtanh.bf16.pop %v1010
        %v1027 = vtanh.bf16.pop %v1011
        %v1028 = vtanh.bf16.pop %v1012
        %v1029 = vtanh.bf16.pop %v1013
        %v1030 = vtanh.bf16.pop %v1014
        %v1031 = vtanh.bf16.pop %v1015
        %v1032 = vtanh.bf16.pop %v1016
        %v1033 = vtanh.bf16.pop %v1017
        %v1034 = vtanh.bf16.pop %v1018
        %v1035 = vtanh.bf16.pop %v1019
        %v1036 = vtanh.bf16.pop %v1020
        %v1037 = vtanh.bf16.pop %v1021
        %v1038 = vtanh.bf16.pop %v1022
        %v1039 = vtanh.bf16.pop %v1023
        %v1040 = vtanh.bf16.pop %v1024
        %v1057 = vunpack.c.l.b16 %v1025
        %v1058 = vunpack.c.h.b16 %v1025
        %v1059 = vunpack.c.l.b16 %v1026
        %v1060 = vunpack.c.h.b16 %v1026
        %v1061 = vunpack.c.l.b16 %v1027
        %v1062 = vunpack.c.h.b16 %v1027
        %v1063 = vunpack.c.l.b16 %v1028
        %v1064 = vunpack.c.h.b16 %v1028
        %v1065 = vunpack.c.l.b16 %v1029
        %v1066 = vunpack.c.h.b16 %v1029
        %v1067 = vunpack.c.l.b16 %v1030
        %v1068 = vunpack.c.h.b16 %v1030
        %v1069 = vunpack.c.l.b16 %v1031
        %v1070 = vunpack.c.h.b16 %v1031
        %v1071 = vunpack.c.l.b16 %v1032
        %v1072 = vunpack.c.h.b16 %v1032
        %v1073 = vunpack.c.l.b16 %v1033
        %v1074 = vunpack.c.h.b16 %v1033
        %v1075 = vunpack.c.l.b16 %v1034
        %v1076 = vunpack.c.h.b16 %v1034
        %v1077 = vunpack.c.l.b16 %v1035
        %v1078 = vunpack.c.h.b16 %v1035
        %v1079 = vunpack.c.l.b16 %v1036
        %v1080 = vunpack.c.h.b16 %v1036
        %v1081 = vunpack.c.l.b16 %v1037
        %v1082 = vunpack.c.h.b16 %v1037
        %v1083 = vunpack.c.l.b16 %v1038
        %v1084 = vunpack.c.h.b16 %v1038
        %v1085 = vunpack.c.l.b16 %v1039
        %v1086 = vunpack.c.h.b16 %v1039
        %v1087 = vunpack.c.l.b16 %v1040
        %v1088 = vunpack.c.h.b16 %v1040
        %v1089 = vpack.c.b16 %v1057, %v1057
        %v1090 = vpack.c.b16 %v1058, %v1058
        %v1091 = vpack.c.b16 %v1059, %v1059
        %v1092 = vpack.c.b16 %v1060, %v1060
        %v1093 = vpack.c.b16 %v1061, %v1061
        %v1094 = vpack.c.b16 %v1062, %v1062
        %v1095 = vpack.c.b16 %v1063, %v1063
        %v1096 = vpack.c.b16 %v1064, %v1064
        %v1097 = vpack.c.b16 %v1065, %v1065
        %v1098 = vpack.c.b16 %v1066, %v1066
        %v1099 = vpack.c.b16 %v1067, %v1067
        %v1100 = vpack.c.b16 %v1068, %v1068
        %v1101 = vpack.c.b16 %v1069, %v1069
        %v1102 = vpack.c.b16 %v1070, %v1070
        %v1103 = vpack.c.b16 %v1071, %v1071
        %v1104 = vpack.c.b16 %v1072, %v1072
        %v1105 = vpack.c.b16 %v1073, %v1073
        %v1106 = vpack.c.b16 %v1074, %v1074
        %v1107 = vpack.c.b16 %v1075, %v1075
        %v1108 = vpack.c.b16 %v1076, %v1076
        %v1109 = vpack.c.b16 %v1077, %v1077
        %v1110 = vpack.c.b16 %v1078, %v1078
        %v1111 = vpack.c.b16 %v1079, %v1079
        %v1112 = vpack.c.b16 %v1080, %v1080
        %v1113 = vpack.c.b16 %v1081, %v1081
        %v1114 = vpack.c.b16 %v1082, %v1082
        %v1115 = vpack.c.b16 %v1083, %v1083
        %v1116 = vpack.c.b16 %v1084, %v1084
        %v1117 = vpack.c.b16 %v1085, %v1085
        %v1118 = vpack.c.b16 %v1086, %v1086
        %v1119 = vpack.c.b16 %v1087, %v1087
        %v1120 = vpack.c.b16 %v1088, %v1088
        %1153 = vst [vmem:[%s294] sm:$0xf] %v1089
        %1154 = vst [vmem:[%s294 + $0x4] sm:$0xf] %v1090
        %1155 = vst [vmem:[%s294 + $0x8] sm:$0xf] %v1091
        %1156 = vst [vmem:[%s294 + $0xc] sm:$0xf] %v1092
        %1157 = vst [vmem:[%s294 + $0x10] sm:$0xf] %v1093
        %1158 = vst [vmem:[%s294 + $0x14] sm:$0xf] %v1094
        %1159 = vst [vmem:[%s294 + $0x18] sm:$0xf] %v1095
        %1160 = vst [vmem:[%s294 + $0x1c] sm:$0xf] %v1096
        %1161 = vst [vmem:[%s294 + $0x20] sm:$0xf] %v1097
        %1162 = vst [vmem:[%s294 + $0x24] sm:$0xf] %v1098
        %1163 = vst [vmem:[%s294 + $0x28] sm:$0xf] %v1099
        %1164 = vst [vmem:[%s294 + $0x2c] sm:$0xf] %v1100
        %1165 = vst [vmem:[%s294 + $0x30] sm:$0xf] %v1101
        %1166 = vst [vmem:[%s294 + $0x34] sm:$0xf] %v1102
        %1167 = vst [vmem:[%s294 + $0x38] sm:$0xf] %v1103
        %1168 = vst [vmem:[%s294 + $0x3c] sm:$0xf] %v1104
        %1169 = vst [vmem:[%s294 + $0x40] sm:$0xf] %v1105
        %1170 = vst [vmem:[%s294 + $0x44] sm:$0xf] %v1106
        %1171 = vst [vmem:[%s294 + $0x48] sm:$0xf] %v1107
        %1172 = vst [vmem:[%s294 + $0x4c] sm:$0xf] %v1108
        %1173 = vst [vmem:[%s294 + $0x50] sm:$0xf] %v1109
        %1174 = vst [vmem:[%s294 + $0x54] sm:$0xf] %v1110
        %1175 = vst [vmem:[%s294 + $0x58] sm:$0xf] %v1111
        %1176 = vst [vmem:[%s294 + $0x5c] sm:$0xf] %v1112
        %1177 = vst [vmem:[%s294 + $0x60] sm:$0xf] %v1113
        %1178 = vst [vmem:[%s294 + $0x64] sm:$0xf] %v1114
        %1179 = vst [vmem:[%s294 + $0x68] sm:$0xf] %v1115
        %1180 = vst [vmem:[%s294 + $0x6c] sm:$0xf] %v1116
        %1181 = vst [vmem:[%s294 + $0x70] sm:$0xf] %v1117
        %1182 = vst [vmem:[%s294 + $0x74] sm:$0xf] %v1118
        %1183 = vst [vmem:[%s294 + $0x78] sm:$0xf] %v1119
        %1184 = vst [vmem:[%s294 + $0x7c] sm:$0xf] %v1120
        %s1185 = sand.u32 %s142, 1
        %s1186 = scalar_lea.sflag [#allocation4], %s1185
        %s1187 = sand.u32 %s142, 1
        %s1188 = smul.addr %s1187, 128
        %s1189 = scalar_lea.vmem [#allocation11], %s1188
        // Predicated region
        $region61: #{tpu_custom_call.1} parent=39 // pred_check
          %p1190 = pneg %p152
        $region62: #{tpu_custom_call.1} parent=39 // pred_check_branch
          %1192 = sbr.rel (%p1190) target = $region64
        $region63: #{tpu_custom_call.1} parent=39 // pred_region
          %s1193 = smul.u32 32, %s24
          %s1195 = ssub.s32 2048, 2048
          %1196 = vsyncadd %s1186, %s1195
          %s1197 = smul.addr %s1193, 64
          %s1198 = scalar_lea.hbm %s5, %s1197
          %s1199 = sshll.u32 %s1189, 4
          %s1200 = int_to_ptr.vmem [resolvable:$true] %s1199
          %1205 = dma.vmem_to_hbm [thread:$0]  %s1200, 2048, %s1198, %s1186, 64, 64, 4
        $region64: #{tpu_custom_call.1} parent=39 // pred_fallthru
          _
      $region40: #{tpu_custom_call.1} parent=5 // pred_fallthru
        _
      %p1206 = scmp.le.s32.totalorder 2, %s19
      // Predicated region
      $region65: #{tpu_custom_call.1} parent=5 // pred_check
        %p1207 = pneg %p1206
      $region66: #{tpu_custom_call.1} parent=5 // pred_check_branch
        %1209 = sbr.rel (%p1207) target = $region68
      $region67: #{tpu_custom_call.1} parent=5 // pred_region
        %s1210 = ssub.s32 %s19, 2
        // Predicated region
        $region69: #{tpu_custom_call.1} parent=67 // pred_check
          %p1211 = pneg %p158
        $region70: #{tpu_custom_call.1} parent=67 // pred_check_branch
          %1213 = sbr.rel (%p1211) target = $region72
        $region71: #{tpu_custom_call.1} parent=67 // pred_region
          %s1214 = sand.u32 %s143, 1
          %s1215 = scalar_lea.sflag [#allocation4], %s1214
          %s1216 = sand.u32 %s143, 1
          %s1217 = smul.addr %s1216, 128
          %s1218 = scalar_lea.vmem [#allocation11], %s1217
          %1219 = dma.done %s1215, 2048
        $region72: #{tpu_custom_call.1} parent=67 // pred_fallthru
          _
      $region68: #{tpu_custom_call.1} parent=5 // pred_fallthru
        _
    $region6: #{tpu_custom_call.1} parent=1 // loop_footer
      %s23 = sadd.s32 1, %s19
    $region7: #{tpu_custom_call.1} parent=1 // loop_footer_branch
      %18 = sbr.rel target = $region3
    $region8: #{tpu_custom_call.1} parent=1 // loop_exit
      _
    %1220 = vsyncpa [#allocation3], 1
    %s1221 = scalar_lea.sflag [#allocation3], 1
    %1222 = vsyncpa %s1221, 1
    %1223 = vsyncpa [#allocation6], 1
    %1224 = vsyncpa [#allocation9], 1
    %1225 = vsyncpa [#allocation4], 1
    %s1226 = scalar_lea.sflag [#allocation4], 1
    %1227 = vsyncpa %s1226, 1

</llo_original>
